<compile_context>
chip_gen: v5e
topology: v5e:2x2
jax: 0.10.0
libtpu: 0.0.40
codegen_flags: <defaults>
</compile_context>

<pallas_src>
import functools

import jax
import jax.numpy as jnp
from jax.experimental import pallas as pl
from jax.experimental.pallas import tpu as pltpu


def _round_down(x: int, m: int) -> int:
    return max(m, (x // m) * m)


def _lora_kernel(x_ref, wd_ref, wu_ref, o_ref, down_ref, *, compute_dtype):
    # Down projection: computed once per row tile (j == 0), cached in f32 VMEM scratch.
    @pl.when(pl.program_id(1) == 0)
    def _():
        down_ref[...] = jnp.dot(
            x_ref[...].astype(compute_dtype), wd_ref[...],
            preferred_element_type=jnp.float32)

    # Up projection for this out_dim tile: [tm, rank] @ [rank, tn] -> [tm, tn] (lane-dense).
    o_ref[...] = jnp.dot(
        down_ref[...].astype(wu_ref.dtype), wu_ref[...],
        preferred_element_type=jnp.float32).astype(o_ref.dtype)


@functools.partial(jax.jit, static_argnames=("tm", "tn", "compute_dtype"))
def lora_forward(hidden_states, w_down_t, w_up_t, *, tm=256, tn=512,
                 compute_dtype=jnp.bfloat16):
    """hidden_states: [..., in_dim]; w_down_t: [in_dim, rank]; w_up_t: [rank, out_dim]."""
    orig_dtype = hidden_states.dtype
    in_dim, rank = w_down_t.shape
    rank2, out_dim = w_up_t.shape
    assert rank == rank2

    lead_shape = hidden_states.shape[:-1]
    # Keep the activation in its original dtype (cast happens in-kernel; no extra HBM pass).
    x2d = hidden_states.reshape(-1, in_dim)
    M = x2d.shape[0]

    # Row tile: full M when it fits (any size == full dim is legal), otherwise a multiple of 8;
    # the last (partial) block is handled by Pallas, no wrapper padding.
    tm_eff = M if M <= tm else _round_down(min(tm, M), 8)
    # out_dim tile: full out_dim when it fits, otherwise a multiple of 128 (lane-dense stores);
    # last partial block handled by Pallas.
    tn_eff = out_dim if out_dim <= tn else _round_down(min(tn, out_dim), 128)

    # Dtype work on the (tiny) weights once in the wrapper; bf16 operands for MXU throughput.
    wd = w_down_t.astype(compute_dtype)
    wu = w_up_t.astype(compute_dtype)

    grid = (pl.cdiv(M, tm_eff), pl.cdiv(out_dim, tn_eff))

    x_bytes = jnp.dtype(orig_dtype).itemsize
    c_bytes = jnp.dtype(compute_dtype).itemsize

    # Double-buffered x / w_down / w_up / out tiles + f32 down scratch.
    vmem_est = (2 * tm_eff * in_dim * x_bytes
                + 2 * in_dim * rank * c_bytes
                + 2 * rank * tn_eff * c_bytes
                + 2 * tm_eff * tn_eff * x_bytes
                + tm_eff * rank * 4)
    vmem_limit = min(max(2 * vmem_est, 32 * 1024 * 1024), 50 * 1024 * 1024)

    cost = pl.CostEstimate(
        flops=2 * M * rank * (in_dim + out_dim),
        transcendentals=0,
        bytes_accessed=(M * in_dim * x_bytes
                        + M * out_dim * x_bytes
                        + in_dim * rank * c_bytes
                        + rank * out_dim * c_bytes),
    )

    out2d = pl.pallas_call(
        functools.partial(_lora_kernel, compute_dtype=compute_dtype),
        out_shape=jax.ShapeDtypeStruct((M, out_dim), orig_dtype),
        grid_spec=pltpu.PrefetchScalarGridSpec(
            num_scalar_prefetch=0,
            grid=grid,
            in_specs=[
                # x tile: constant across j -> fetched once per row tile.
                pl.BlockSpec((tm_eff, in_dim), lambda i, j: (i, 0)),
                # weights: constant index_maps -> resident across the whole grid.
                pl.BlockSpec((in_dim, rank), lambda i, j: (0, 0)),
                pl.BlockSpec((rank, tn_eff), lambda i, j: (0, j)),
            ],
            out_specs=pl.BlockSpec((tm_eff, tn_eff), lambda i, j: (i, j)),
            scratch_shapes=[pltpu.VMEM((tm_eff, rank), jnp.float32)],
        ),
        compiler_params=pltpu.CompilerParams(
            dimension_semantics=("parallel", "arbitrary"),
            vmem_limit_bytes=vmem_limit,
        ),
        cost_estimate=cost,
    )(x2d, wd, wu)

    return out2d.reshape(*lead_shape, out_dim)


def init_lora_params(key, in_dim, out_dim, rank, dtype=jnp.float32):
    """Matches the PyTorch module init:
       down.weight ~ Normal(0, 1/sqrt(rank)), shape (rank, in_dim)
       up.weight   = zeros,                   shape (out_dim, rank)
       Returned pre-transposed for the kernel."""
    std = 1.0 / jnp.sqrt(jnp.asarray(rank, dtype=jnp.float32))
    down_w = (jax.random.normal(key, (rank, in_dim), dtype=jnp.float32) * std).astype(dtype)
    up_w = jnp.zeros((out_dim, rank), dtype=dtype)
    return down_w.T, up_w.T  # [in_dim, rank], [rank, out_dim]


if __name__ == "__main__":
    key = jax.random.PRNGKey(0)
    k_x, k_down, k_x2, k_d2, k_u2 = jax.random.split(key, 5)

    # 1) Module-faithful init (up weight is zero -> output is zero), bf16 activations.
    batch, seq, in_dim, out_dim, rank = 2, 8, 32, 32, 4
    x = jax.random.normal(k_x, (batch, seq, in_dim), dtype=jnp.float32).astype(jnp.bfloat16)
    w_down_t, w_up_t = init_lora_params(k_down, in_dim, out_dim, rank, dtype=jnp.float32)

    out = jax.block_until_ready(lora_forward(x, w_down_t, w_up_t))
    assert out.shape == (batch, seq, out_dim)
    assert out.dtype == x.dtype
    ref = (x.astype(jnp.float32) @ w_down_t @ w_up_t).astype(x.dtype)
    assert jnp.allclose(out.astype(jnp.float32), ref.astype(jnp.float32), atol=1e-2)

    # 2) Non-zero up projection + shapes that exercise partial row/column tiles
    #    (M = 150 with tm = 64; out_dim = 192 with tn = 128), f32 activations.
    b2, s2, in2, od2, r2 = 3, 50, 96, 192, 8
    x2 = jax.random.normal(k_x2, (b2, s2, in2), dtype=jnp.float32)
    wd2 = jax.random.normal(k_d2, (in2, r2), dtype=jnp.float32) * (1.0 / jnp.sqrt(r2))
    wu2 = jax.random.normal(k_u2, (r2, od2), dtype=jnp.float32) * 0.1

    out2 = jax.block_until_ready(lora_forward(x2, wd2, wu2, tm=64, tn=128))
    assert out2.shape == (b2, s2, od2)
    assert out2.dtype == x2.dtype

    # Reference mirroring the kernel numerics (bf16 operands, f32 accumulation).
    xb = x2.astype(jnp.bfloat16).astype(jnp.float32)
    wdb = wd2.astype(jnp.bfloat16).astype(jnp.float32)
    wub = wu2.astype(jnp.bfloat16).astype(jnp.float32)
    down_f32 = xb @ wdb
    ref2 = down_f32.astype(jnp.bfloat16).astype(jnp.float32) @ wub
    assert jnp.allclose(out2, ref2, atol=2e-2, rtol=2e-2), "mismatch vs reference"

    print("KERNEL_OK")
</pallas_src>

<mosaic_0001>
module attributes {stable_mosaic.version = 11 : i64} {
  func.func @_lora_kernel(%arg0: i32, %arg1: i32, %arg2: memref<16x32xbf16, #tpu.memory_space<vmem>>, %arg3: memref<32x4xbf16, #tpu.memory_space<vmem>>, %arg4: memref<4x32xbf16, #tpu.memory_space<vmem>>, %arg5: memref<16x32xbf16, #tpu.memory_space<vmem>>, %arg6: memref<16x4xf32, #tpu.memory_space<vmem>>) attributes {dimension_semantics = [#tpu.dimension_semantics<parallel>, #tpu.dimension_semantics<arbitrary>], iteration_bounds = array<i64: 1, 1>, scalar_prefetch = 0 : i64, scratch_operands = 1 : i64, tpu.core_type = #tpu.core_type<tc>, window_params = [{transform_indices = @transform_0, window_bounds = array<i64: 16, 32>}, {pipeline_mode = #tpu.pipeline_mode<synchronous>, transform_indices = @transform_1, window_bounds = array<i64: 32, 4>}, {transform_indices = @transform_2, window_bounds = array<i64: 4, 32>}, {transform_indices = @transform_3, window_bounds = array<i64: 16, 32>}]} {
    %c0_i32 = arith.constant 0 : i32
    %0 = arith.cmpi eq, %arg1, %c0_i32 : i32
    %1 = arith.extui %0 : i1 to i32
    %c0_i32_0 = arith.constant 0 : i32
    %2 = arith.cmpi ne, %1, %c0_i32_0 : i32
    scf.if %2 {
      %c0_6 = arith.constant 0 : index
      %c0_7 = arith.constant 0 : index
      %9 = vector.load %arg2[%c0_6, %c0_7] : memref<16x32xbf16, #tpu.memory_space<vmem>>, vector<16x32xbf16>
      %c0_8 = arith.constant 0 : index
      %c0_9 = arith.constant 0 : index
      %10 = vector.load %arg3[%c0_8, %c0_9] : memref<32x4xbf16, #tpu.memory_space<vmem>>, vector<32x4xbf16>
      %cst_10 = arith.constant dense<0.000000e+00> : vector<16x4xf32>
      %11 = tpu.matmul %9, %10, %cst_10 {dimension_numbers = #tpu.dot_dimension_numbers<[1], [0], [0], [1], [0, 0, 1, 1], [], []>} : vector<16x32xbf16>, vector<32x4xbf16>, vector<16x4xf32> -> vector<16x4xf32>
      %c0_11 = arith.constant 0 : index
      %c0_12 = arith.constant 0 : index
      %12 = vector.load %arg6[%c0_11, %c0_12] : memref<16x4xf32, #tpu.memory_space<vmem>>, vector<16x4xf32>
      tpu.vector_store %arg6[%c0_11, %c0_12], %11 {strides = array<i32>} : memref<16x4xf32, #tpu.memory_space<vmem>>, vector<16x4xf32>,
    } else {
    }
    %c0 = arith.constant 0 : index
    %c0_1 = arith.constant 0 : index
    %3 = vector.load %arg6[%c0, %c0_1] : memref<16x4xf32, #tpu.memory_space<vmem>>, vector<16x4xf32>
    %4 = arith.truncf %3 : vector<16x4xf32> to vector<16x4xbf16>
    %c0_2 = arith.constant 0 : index
    %c0_3 = arith.constant 0 : index
    %5 = vector.load %arg4[%c0_2, %c0_3] : memref<4x32xbf16, #tpu.memory_space<vmem>>, vector<4x32xbf16>
    %cst = arith.constant dense<0.000000e+00> : vector<16x32xf32>
    %6 = tpu.matmul %4, %5, %cst {dimension_numbers = #tpu.dot_dimension_numbers<[1], [0], [0], [1], [0, 0, 1, 1], [], []>} : vector<16x4xbf16>, vector<4x32xbf16>, vector<16x32xf32> -> vector<16x32xf32>
    %7 = arith.truncf %6 : vector<16x32xf32> to vector<16x32xbf16>
    %c0_4 = arith.constant 0 : index
    %c0_5 = arith.constant 0 : index
    %8 = vector.load %arg5[%c0_4, %c0_5] : memref<16x32xbf16, #tpu.memory_space<vmem>>, vector<16x32xbf16>
    tpu.vector_store %arg5[%c0_4, %c0_5], %7 {strides = array<i32>} : memref<16x32xbf16, #tpu.memory_space<vmem>>, vector<16x32xbf16>,
    return
  }
  func.func @transform_0(%arg0: i32, %arg1: i32) -> (i32, i32) {
    %c0_i32 = arith.constant 0 : i32
    %c0_i32_0 = arith.constant 0 : i32
    return %arg0, %c0_i32 : i32, i32
  }
  func.func @transform_1(%arg0: i32, %arg1: i32) -> (i32, i32) {
    %c0_i32 = arith.constant 0 : i32
    %c0_i32_0 = arith.constant 0 : i32
    %c0_i32_1 = arith.constant 0 : i32
    return %c0_i32, %c0_i32_0 : i32, i32
  }
  func.func @transform_2(%arg0: i32, %arg1: i32) -> (i32, i32) {
    %c0_i32 = arith.constant 0 : i32
    %c0_i32_0 = arith.constant 0 : i32
    return %c0_i32, %arg1 : i32, i32
  }
  func.func @transform_3(%arg0: i32, %arg1: i32) -> (i32, i32) {
    %c0_i32 = arith.constant 0 : i32
    return %arg0, %arg1 : i32, i32
  }
}

</mosaic_0001>

<llo_original>
// kernel: lora_forward.1
$region0: #{lora_forward.1}
  #allocation0 [shape = 'u32[]', space=smem, size = 0x4, offset = 0x4, fixed_abs, tag = 'smem constant byte address 0x4 - core index']
  #allocation1 [shape = 'u32[72,128]{1,0:T(1,128)}', space=vmem, size = 0x9000, scoped, tag = 'internal scratch']
  #allocation2 [shape = 'f32[16,4]{1,0:T(8,128)}', space=vmem, size = 0x2000, scoped, tag = 'scratch operand']
  %s0 = inlined_call_operand.vmem [shape: bf16[16,32], index: 0, kind: input, shape index: {}]
  %s1 = inlined_call_operand.vmem [shape: bf16[32,4], index: 1, kind: input, shape index: {}]
  %s2 = inlined_call_operand.vmem [shape: bf16[4,32], index: 2, kind: input, shape index: {}]
  %s3 = inlined_call_operand.hbm [shape: bf16[16,32], index: 3, kind: output, shape index: {}]
  %s4 = sld [smem:[#allocation0]]
  $region26: #{lora_forward.1} parent=0
    _
  %s6 = ssub.s32 1, %s4
  %s7 = scalar_select 0, %s6, %s4
  $region1: #{lora_forward.1} parent=0
    #allocation3 [shape = 'u8[4096]{0}', space=vmem, size = 0x1000, scoped, tag = 'output window, operand 0, single buffered']
    #allocation4 [shape = 's32[1]{0}', space=sflag, size = 0x4, scoped, tag = 'scoped memory for lora_forward.1']
    %8 = vsyncpa [#allocation4], 0
    // Predicated region
    $region2: #{lora_forward.1} parent=1 // pred_check
      _
    $region3: #{lora_forward.1} parent=1 // pred_check_branch
      %10 = sbr.rel (0) target = $region5
    $region4: #{lora_forward.1} parent=1 // pred_region
      _
    $region5: #{lora_forward.1} parent=1 // pred_fallthru
      _
    // Predicated region
    $region6: #{lora_forward.1} parent=1 // pred_check
      _
    $region7: #{lora_forward.1} parent=1 // pred_check_branch
      %12 = sbr.rel (0) target = $region9
    $region8: #{lora_forward.1} parent=1 // pred_region
      _
    $region9: #{lora_forward.1} parent=1 // pred_fallthru
      _
    // Predicated region
    $region10: #{lora_forward.1} parent=1 // pred_check
      _
    $region11: #{lora_forward.1} parent=1 // pred_check_branch
      %14 = sbr.rel (0) target = $region13
    $region12: #{lora_forward.1} parent=1 // pred_region
      _
    $region13: #{lora_forward.1} parent=1 // pred_fallthru
      _
    %p16 = scmp.eq.s32.totalorder 0, 0
    // Predicated region
    $region14: #{lora_forward.1} parent=1 // pred_check
      %p17 = pneg %p16
    $region15: #{lora_forward.1} parent=1 // pred_check_branch
      %19 = sbr.rel (%p17) target = $region17
    $region16: #{lora_forward.1} parent=1 // pred_region
      %v20 = vld [vmem:[%s0] sm:$0xf]
      %v21 = vld [vmem:[%s0 + $0x4] sm:$0xf]
      %v22 = vld [vmem:[%s1] sm:$0xf]
      %v23 = vld [vmem:[%s1 + $0x4] sm:$0xf]
      %v24 = vld [vmem:[%s1 + $0x8] sm:$0xf]
      %v25 = vld [vmem:[%s1 + $0xc] sm:$0xf]
      %v28 = vunpack.c.l.b16 %v20
      %v29 = vunpack.c.l.b16 %v21
      %v30 = vpack.c.b16 %v29, %v28
      %v35 = vunpack.c.l.b16 %v22
      %v36 = vunpack.c.l.b16 %v23
      %v37 = vunpack.c.l.b16 %v24
      %v38 = vunpack.c.l.b16 %v25
      %v39 = vpack.c.b16 %v36, %v35
      %v40 = vpack.c.b16 %v38, %v37
      %vm43 = vcmask 261120
      %v45 = vsel %vm43, %v30, 0
      %47 = vmatpush.bf16.msra.mxu0 0
      %48 = vmatpush.bf16.msra.mxu0 0
      %49 = vmatpush.bf16.msra.mxu0 0
      %50 = vmatpush.bf16.msra.mxu0 0
      %51 = vmatpush.bf16.msra.mxu0 0
      %52 = vmatpush.bf16.msra.mxu0 0
      %53 = vmatpush.bf16.msra.mxu0 %v40
      %54 = vmatpush.bf16.msra.mxu0 %v39
      %55 = vmatmul.bf16.gmra.mxu0 %v45
      %v56 = vpop.f32.mrf.mxu0
      %v57 = vadd.f32 0.0, %v56
      %v58 = vpop.f32.mrf.mxu0
      %v59 = vadd.f32 0.0, %v58
      %60 = vdwg.mxu0
      %vm61 = vcmask 31744
      %62 = vst.msk [vmem:[#allocation2] sm:$0xff] %vm61, %v57
      %63 = vst.msk [vmem:[#allocation2 + $0x8] sm:$0xff] %vm61, %v59
    $region17: #{lora_forward.1} parent=1 // pred_fallthru
      _
    %v64 = vld [vmem:[#allocation2] sm:$0xff]
    %v65 = vld [vmem:[#allocation2 + $0x8] sm:$0xff]
    %v66 = vpack.c.bf16 %v65, %v64
    %v67 = vld [vmem:[%s2] sm:$0x3]
    %vm68 = vcmask 31744
    %v70 = vsel %vm68, %v66, 0
    %vm72 = vcmask 1041408
    %v74 = vsel %vm72, %v67, 0
    %76 = vmatpush.bf16.msra.mxu0 0
    %77 = vmatpush.bf16.msra.mxu0 0
    %78 = vmatpush.bf16.msra.mxu0 0
    %79 = vmatpush.bf16.msra.mxu0 0
    %80 = vmatpush.bf16.msra.mxu0 0
    %81 = vmatpush.bf16.msra.mxu0 0
    %82 = vmatpush.bf16.msra.mxu0 0
    %83 = vmatpush.bf16.msra.mxu0 %v74
    %84 = vmatmul.bf16.gmra.mxu0 %v70
    %v85 = vpop.f32.mrf.mxu0
    %v86 = vadd.f32 0.0, %v85
    %v87 = vpop.f32.mrf.mxu0
    %v88 = vadd.f32 0.0, %v87
    %89 = vdwg.mxu0
    %v90 = vpack.c.bf16 %v86, %v86
    %v91 = vpack.c.bf16 %v88, %v88
    %vm92 = vcmask 257024
    %93 = vst.msk [vmem:[#allocation3] sm:$0xf] %vm92, %v90
    %94 = vst.msk [vmem:[#allocation3 + $0x4] sm:$0xf] %vm92, %v91
    // Predicated region
    $region18: #{lora_forward.1} parent=1 // pred_check
      _
    $region19: #{lora_forward.1} parent=1 // pred_check_branch
      %96 = sbr.rel (0) target = $region21
    $region20: #{lora_forward.1} parent=1 // pred_region
      %98 = vsyncadd [#allocation4], 0
      %s99 = sshll.u32 [#allocation3], 4
      %s100 = int_to_ptr.vmem [resolvable:$true] %s99
      %s101 = sshll.u32 %s3, 4
      %s102 = int_to_ptr.hbm [resolvable:$true] %s101
      %107 = dma.vmem_to_hbm [thread:$0]  %s100, 128, %s102, [#allocation4], 64, 64, 4
    $region21: #{lora_forward.1} parent=1 // pred_fallthru
      _
    // Predicated region
    $region22: #{lora_forward.1} parent=1 // pred_check
      _
    $region23: #{lora_forward.1} parent=1 // pred_check_branch
      %109 = sbr.rel (0) target = $region25
    $region24: #{lora_forward.1} parent=1 // pred_region
      %111 = dma.done [#allocation4], 128
    $region25: #{lora_forward.1} parent=1 // pred_fallthru
      _
    %112 = vsyncpa [#allocation4], 1

</llo_original>
